<compile_context>
chip_gen: v5e
topology: v5e:2x2
jax: 0.10.0
libtpu: 0.0.40
codegen_flags: <defaults>
</compile_context>

<pallas_src>
import functools

import jax
import jax.numpy as jnp
from jax.experimental import pallas as pl
from jax.experimental.pallas import tpu as pltpu

_MIB = 1024 * 1024


def _round_up(v: int, m: int) -> int:
    return pl.cdiv(v, m) * m


def _vmem_capacity_bytes() -> int:
    """Best-effort per-core VMEM query; default to the smallest (v7x, 64 MiB)."""
    try:
        info = pltpu.get_tpu_info()
        cap = getattr(info, "vmem_capacity_bytes", None)
        if cap:
            return int(cap)
    except Exception:
        pass
    return 64 * _MIB


def _generation_defaults():
    """(default batch tile, scoped vmem limit) per TPU generation."""
    cap = _vmem_capacity_bytes()
    if cap >= 100 * _MIB:          # v5e / v6e: 128 MiB VMEM -> big tiles, big limit
        return 512, 64 * _MIB
    return 256, 36 * _MIB          # v7x-class: 64 MiB VMEM -> conservative


def _block_spec(shape, index_map, buffers=None):
    """BlockSpec with optional pipeline depth; falls back if pipeline_mode unsupported."""
    if buffers is not None:
        try:
            return pl.BlockSpec(shape, index_map, pipeline_mode=pl.Buffered(buffers))
        except Exception:
            pass
    return pl.BlockSpec(shape, index_map)


def _make_mlp_kernel(num_layers: int):
    """Fused MLP kernel: (x_ref, w0, b0, ..., w{L-1}, b{L-1}, out_ref)."""

    def kernel(x_ref, *refs):
        out_ref = refs[-1]
        params = refs[:-1]
        h = x_ref[...]                                    # bf16 (tile, in_p)
        for i in range(num_layers):
            w = params[2 * i][...]                        # bf16 (in_p_i, out_p_i)
            b = params[2 * i + 1][...]                    # f32  (1, out_p_i)
            acc = jnp.dot(h, w, preferred_element_type=jnp.float32) + b
            if i < num_layers - 1:
                h = jnp.maximum(acc, 0.0).astype(jnp.bfloat16)   # next MXU input
            else:
                h = acc                                   # final layer stays f32
        out_ref[...] = h.astype(out_ref.dtype)

    return kernel


def init_mlp_params(key, in_features: int, features):
    """kaiming_normal_ (fan_in, gain=sqrt(2)) weights, zero biases.

    Returns a list of (W, b) in PyTorch layout: W is (out, in), b is (out,).
    """
    params = []
    curr = in_features
    for feat in features:
        key, sub = jax.random.split(key)
        std = (2.0 / curr) ** 0.5
        w = std * jax.random.normal(sub, (feat, curr), dtype=jnp.float32)
        b = jnp.zeros((feat,), dtype=jnp.float32)
        params.append((w, b))
        curr = feat
    return params


def pack_mlp_params(params):
    """One-time packing: transpose, pad features to 128 lanes, cast weights to bf16.

    Call ONCE and reuse — keeps the per-forward path free of XLA transpose/pad/cast
    traffic.  Returns (packed_arrays, out_features).
    """
    packed = []
    in_features = params[0][0].shape[1]
    curr_p = _round_up(in_features, 128)
    for w, b in params:
        out_f, in_f = w.shape
        out_p = _round_up(out_f, 128)
        wt = jnp.pad(jnp.transpose(w), ((0, curr_p - in_f), (0, out_p - out_f)))
        packed.append(wt.astype(jnp.bfloat16))                           # (in_p, out_p)
        packed.append(jnp.pad(b, (0, out_p - out_f)).reshape(1, -1)
                      .astype(jnp.float32))                              # (1, out_p)
        curr_p = out_p
    return tuple(packed), params[-1][0].shape[0]


@functools.partial(jax.jit, static_argnames=("out_features", "tile_n", "out_dtype"))
def mlp_forward(x, packed_params, *, out_features, tile_n=None, out_dtype=jnp.float32):
    """Fused MLP forward.  x: (N, in_features) f32; packed_params from pack_mlp_params."""
    n, in_features = x.shape
    packed_params = tuple(packed_params)
    num_layers = len(packed_params) // 2
    in_p = packed_params[0].shape[0]
    out_p_final = packed_params[-1].shape[1]
    weight_bytes = sum(int(p.size) * jnp.dtype(p.dtype).itemsize for p in packed_params)

    gen_tile, vmem_limit = _generation_defaults()
    if tile_n is None:
        tile_n = gen_tile

    # Batch tile: multiple of 16 (bf16 sublanes / f32 rows); never pad a tiny batch
    # past its own next multiple of 16.
    tile = max(16, _round_up(min(tile_n, _round_up(n, 16)), 16))

    # Keep >=2 grid steps for moderate/large N so the "parallel" batch axis can be
    # sharded across v7x's 2 TensorCores (harmless on single-core v5e/v6e).
    if _round_up(n, tile) // tile == 1 and tile >= 256:
        half = _round_up(pl.cdiv(n, 2), 16)
        if half >= 128:
            tile = half

    # Shrink the tile until the rough VMEM footprint fits the scoped limit.
    widest = max(p.shape[1] for p in packed_params[0::2])

    def footprint(t):
        act = 2 * t * max(in_p, widest) * 4                     # f32 acc + live activation
        io = 3 * t * in_p * 2 + 2 * t * out_p_final * 4         # x (<=3 bufs) + out (2 bufs)
        return weight_bytes + act + io

    while tile > 16 and footprint(tile) > int(0.8 * vmem_limit):
        tile = max(16, _round_up(tile // 2, 16))
    # TODO(synk): for multi-K hidden widths where the single-buffered weights alone
    # exceed ~40% of VMEM, add a second path that tiles output-feature/contraction
    # dims with extra grid axes (reduction axis last, "arbitrary") and a f32 scratch
    # accumulator instead of keeping all weights resident.

    n_pad = _round_up(n, tile)
    grid_steps = n_pad // tile

    x_p = jnp.pad(x, ((0, n_pad - n), (0, in_p - in_features))).astype(jnp.bfloat16)

    # Streaming x: deepen pipeline only when the grid is long (per-step compute is short).
    x_buffers = 3 if grid_steps >= 4 else None
    in_specs = [_block_spec((tile, in_p), lambda i: (i, 0), buffers=x_buffers)]
    for p in packed_params:
        # Grid-invariant weights/biases: single-buffered — their block index never
        # changes, so double-buffering buys zero overlap and doubles resident VMEM.
        in_specs.append(_block_spec(p.shape, lambda i: (0, 0), buffers=1))

    out_spec = pl.BlockSpec((tile, out_p_final), lambda i: (i, 0))

    out = pl.pallas_call(
        _make_mlp_kernel(num_layers),
        out_shape=jax.ShapeDtypeStruct((n_pad, out_p_final), out_dtype),
        grid_spec=pltpu.PrefetchScalarGridSpec(
            num_scalar_prefetch=0,
            grid=(grid_steps,),
            in_specs=in_specs,
            out_specs=out_spec,
        ),
        compiler_params=pltpu.CompilerParams(
            dimension_semantics=("parallel",),
            vmem_limit_bytes=vmem_limit,
        ),
    )(x_p, *packed_params)

    if n_pad == n and out_p_final == out_features:
        return out                       # no padding added -> no slice/copy needed
    return out[:n, :out_features]


def mlp_reference_f32(x, params):
    """Pure-JAX f32 reference matching the PyTorch forward semantics."""
    h = x
    for i, (w, b) in enumerate(params):
        h = h @ w.T + b
        if i < len(params) - 1:
            h = jnp.maximum(h, 0.0)
    return h


def mlp_reference_bf16(x, params):
    """Same numerics as the kernel: bf16 matmul inputs, f32 accumulate/epilogue."""
    h = x
    for i, (w, b) in enumerate(params):
        h = jnp.dot(h.astype(jnp.bfloat16), w.T.astype(jnp.bfloat16),
                    preferred_element_type=jnp.float32) + b
        if i < len(params) - 1:
            h = jnp.maximum(h, 0.0)
    return h


if __name__ == "__main__":
    key = jax.random.PRNGKey(0)

    # Small shapes consistent with the module: MLP(in_features=32, features=[64, 64, 16])
    batch = 2
    in_features = 32
    features = [64, 64, 16]

    key, xk = jax.random.split(key)
    x = jax.random.normal(xk, (batch, in_features), dtype=jnp.float32)

    params = init_mlp_params(key, in_features, features)

    # One-time packing, outside the per-call path.
    packed, out_features = pack_mlp_params(params)
    packed = jax.block_until_ready(packed)

    out = mlp_forward(x, packed, out_features=out_features)
    out = jax.block_until_ready(out)
    assert out.shape == (batch, features[-1]), out.shape

    # Exact-path check vs a reference doing the same bf16-matmul / f32-accumulate.
    ref_bf16 = mlp_reference_bf16(x, params)
    assert jnp.allclose(out, ref_bf16, atol=2e-3, rtol=2e-3), "mismatch vs bf16 reference"

    # Semantic check vs the pure-f32 PyTorch-equivalent forward (bf16 rounding noise only).
    ref_f32 = mlp_reference_f32(x, params)
    assert jnp.allclose(out, ref_f32, atol=5e-2, rtol=5e-2), "mismatch vs f32 reference"

    print("KERNEL_OK")
</pallas_src>

<mosaic_0001>
module attributes {stable_mosaic.version = 11 : i64} {
  func.func @kernel(%arg0: i32, %arg1: memref<16x128xbf16, #tpu.memory_space<vmem>>, %arg2: memref<128x128xbf16, #tpu.memory_space<vmem>>, %arg3: memref<1x128xf32, #tpu.memory_space<vmem>>, %arg4: memref<128x128xbf16, #tpu.memory_space<vmem>>, %arg5: memref<1x128xf32, #tpu.memory_space<vmem>>, %arg6: memref<128x128xbf16, #tpu.memory_space<vmem>>, %arg7: memref<1x128xf32, #tpu.memory_space<vmem>>, %arg8: memref<16x128xf32, #tpu.memory_space<vmem>>) attributes {dimension_semantics = [#tpu.dimension_semantics<parallel>], iteration_bounds = array<i64: 1>, scalar_prefetch = 0 : i64, scratch_operands = 0 : i64, tpu.core_type = #tpu.core_type<tc>, window_params = [{transform_indices = @transform_0, window_bounds = array<i64: 16, 128>}, {pipeline_mode = #tpu.pipeline_mode<synchronous>, transform_indices = @transform_1, window_bounds = array<i64: 128, 128>}, {pipeline_mode = #tpu.pipeline_mode<synchronous>, transform_indices = @transform_2, window_bounds = array<i64: 1, 128>}, {pipeline_mode = #tpu.pipeline_mode<synchronous>, transform_indices = @transform_3, window_bounds = array<i64: 128, 128>}, {pipeline_mode = #tpu.pipeline_mode<synchronous>, transform_indices = @transform_4, window_bounds = array<i64: 1, 128>}, {pipeline_mode = #tpu.pipeline_mode<synchronous>, transform_indices = @transform_5, window_bounds = array<i64: 128, 128>}, {pipeline_mode = #tpu.pipeline_mode<synchronous>, transform_indices = @transform_6, window_bounds = array<i64: 1, 128>}, {transform_indices = @transform_7, window_bounds = array<i64: 16, 128>}]} {
    %c0 = arith.constant 0 : index
    %c0_0 = arith.constant 0 : index
    %0 = vector.load %arg1[%c0, %c0_0] : memref<16x128xbf16, #tpu.memory_space<vmem>>, vector<16x128xbf16>
    %c0_1 = arith.constant 0 : index
    %c0_2 = arith.constant 0 : index
    %1 = vector.load %arg2[%c0_1, %c0_2] : memref<128x128xbf16, #tpu.memory_space<vmem>>, vector<128x128xbf16>
    %c0_3 = arith.constant 0 : index
    %c0_4 = arith.constant 0 : index
    %2 = vector.load %arg3[%c0_3, %c0_4] : memref<1x128xf32, #tpu.memory_space<vmem>>, vector<1x128xf32>
    %cst = arith.constant dense<0.000000e+00> : vector<16x128xf32>
    %3 = tpu.matmul %0, %1, %cst {dimension_numbers = #tpu.dot_dimension_numbers<[1], [0], [0], [1], [0, 0, 1, 1], [], []>} : vector<16x128xbf16>, vector<128x128xbf16>, vector<16x128xf32> -> vector<16x128xf32>
    %4 = vector.broadcast %2 : vector<1x128xf32> to vector<16x128xf32>
    %5 = arith.addf %3, %4 : vector<16x128xf32>
    %cst_5 = arith.constant 0.000000e+00 : f32
    %6 = vector.broadcast %cst_5 : f32 to vector<16x128xf32>
    %7 = arith.maximumf %5, %6 : vector<16x128xf32>
    %8 = arith.truncf %7 : vector<16x128xf32> to vector<16x128xbf16>
    %c0_6 = arith.constant 0 : index
    %c0_7 = arith.constant 0 : index
    %9 = vector.load %arg4[%c0_6, %c0_7] : memref<128x128xbf16, #tpu.memory_space<vmem>>, vector<128x128xbf16>
    %c0_8 = arith.constant 0 : index
    %c0_9 = arith.constant 0 : index
    %10 = vector.load %arg5[%c0_8, %c0_9] : memref<1x128xf32, #tpu.memory_space<vmem>>, vector<1x128xf32>
    %cst_10 = arith.constant dense<0.000000e+00> : vector<16x128xf32>
    %11 = tpu.matmul %8, %9, %cst_10 {dimension_numbers = #tpu.dot_dimension_numbers<[1], [0], [0], [1], [0, 0, 1, 1], [], []>} : vector<16x128xbf16>, vector<128x128xbf16>, vector<16x128xf32> -> vector<16x128xf32>
    %12 = vector.broadcast %10 : vector<1x128xf32> to vector<16x128xf32>
    %13 = arith.addf %11, %12 : vector<16x128xf32>
    %cst_11 = arith.constant 0.000000e+00 : f32
    %14 = vector.broadcast %cst_11 : f32 to vector<16x128xf32>
    %15 = arith.maximumf %13, %14 : vector<16x128xf32>
    %16 = arith.truncf %15 : vector<16x128xf32> to vector<16x128xbf16>
    %c0_12 = arith.constant 0 : index
    %c0_13 = arith.constant 0 : index
    %17 = vector.load %arg6[%c0_12, %c0_13] : memref<128x128xbf16, #tpu.memory_space<vmem>>, vector<128x128xbf16>
    %c0_14 = arith.constant 0 : index
    %c0_15 = arith.constant 0 : index
    %18 = vector.load %arg7[%c0_14, %c0_15] : memref<1x128xf32, #tpu.memory_space<vmem>>, vector<1x128xf32>
    %cst_16 = arith.constant dense<0.000000e+00> : vector<16x128xf32>
    %19 = tpu.matmul %16, %17, %cst_16 {dimension_numbers = #tpu.dot_dimension_numbers<[1], [0], [0], [1], [0, 0, 1, 1], [], []>} : vector<16x128xbf16>, vector<128x128xbf16>, vector<16x128xf32> -> vector<16x128xf32>
    %20 = vector.broadcast %18 : vector<1x128xf32> to vector<16x128xf32>
    %21 = arith.addf %19, %20 : vector<16x128xf32>
    %c0_17 = arith.constant 0 : index
    %c0_18 = arith.constant 0 : index
    %22 = vector.load %arg8[%c0_17, %c0_18] : memref<16x128xf32, #tpu.memory_space<vmem>>, vector<16x128xf32>
    tpu.vector_store %arg8[%c0_17, %c0_18], %21 {strides = array<i32>} : memref<16x128xf32, #tpu.memory_space<vmem>>, vector<16x128xf32>,
    return
  }
  func.func @transform_0(%arg0: i32) -> (i32, i32) {
    %c0_i32 = arith.constant 0 : i32
    %c0_i32_0 = arith.constant 0 : i32
    return %arg0, %c0_i32 : i32, i32
  }
  func.func @transform_1(%arg0: i32) -> (i32, i32) {
    %c0_i32 = arith.constant 0 : i32
    %c0_i32_0 = arith.constant 0 : i32
    %c0_i32_1 = arith.constant 0 : i32
    return %c0_i32, %c0_i32_0 : i32, i32
  }
  func.func @transform_2(%arg0: i32) -> (i32, i32) {
    %c0_i32 = arith.constant 0 : i32
    %c0_i32_0 = arith.constant 0 : i32
    %c0_i32_1 = arith.constant 0 : i32
    return %c0_i32, %c0_i32_0 : i32, i32
  }
  func.func @transform_3(%arg0: i32) -> (i32, i32) {
    %c0_i32 = arith.constant 0 : i32
    %c0_i32_0 = arith.constant 0 : i32
    %c0_i32_1 = arith.constant 0 : i32
    return %c0_i32, %c0_i32_0 : i32, i32
  }
  func.func @transform_4(%arg0: i32) -> (i32, i32) {
    %c0_i32 = arith.constant 0 : i32
    %c0_i32_0 = arith.constant 0 : i32
    %c0_i32_1 = arith.constant 0 : i32
    return %c0_i32, %c0_i32_0 : i32, i32
  }
  func.func @transform_5(%arg0: i32) -> (i32, i32) {
    %c0_i32 = arith.constant 0 : i32
    %c0_i32_0 = arith.constant 0 : i32
    %c0_i32_1 = arith.constant 0 : i32
    return %c0_i32, %c0_i32_0 : i32, i32
  }
  func.func @transform_6(%arg0: i32) -> (i32, i32) {
    %c0_i32 = arith.constant 0 : i32
    %c0_i32_0 = arith.constant 0 : i32
    %c0_i32_1 = arith.constant 0 : i32
    return %c0_i32, %c0_i32_0 : i32, i32
  }
  func.func @transform_7(%arg0: i32) -> (i32, i32) {
    %c0_i32 = arith.constant 0 : i32
    %c0_i32_0 = arith.constant 0 : i32
    return %arg0, %c0_i32 : i32, i32
  }
}

</mosaic_0001>

<llo_original>
// kernel: mlp_forward.1
$region0: #{mlp_forward.1}
  #allocation0 [shape = 'u32[]', space=smem, size = 0x4, offset = 0x4, fixed_abs, tag = 'smem constant byte address 0x4 - core index']
  #allocation1 [shape = 'u32[72,128]{1,0:T(1,128)}', space=vmem, size = 0x9000, scoped, tag = 'internal scratch']
  %s0 = inlined_call_operand.vmem [shape: bf16[16,128], index: 0, kind: input, shape index: {}]
  %s1 = inlined_call_operand.hbm [shape: bf16[128,128], index: 1, kind: input, shape index: {}]
  %s2 = inlined_call_operand.vmem [shape: f32[1,128], index: 2, kind: input, shape index: {}]
  %s3 = inlined_call_operand.hbm [shape: bf16[128,128], index: 3, kind: input, shape index: {}]
  %s4 = inlined_call_operand.vmem [shape: f32[1,128], index: 4, kind: input, shape index: {}]
  %s5 = inlined_call_operand.hbm [shape: bf16[128,128], index: 5, kind: input, shape index: {}]
  %s6 = inlined_call_operand.vmem [shape: f32[1,128], index: 6, kind: input, shape index: {}]
  %s7 = inlined_call_operand.vmem [shape: f32[16,128], index: 7, kind: output, shape index: {}]
  %s8 = sld [smem:[#allocation0]]
  $region50: #{mlp_forward.1} parent=0
    _
  %s10 = ssub.s32 1, %s8
  %s11 = scalar_select 0, %s10, %s8
  $region1: #{mlp_forward.1} parent=0
    #allocation2 [shape = 'u8[32768]{0}', space=vmem, size = 0x8000, scoped, tag = 'input window, operand 1, single buffered']
    #allocation3 [shape = 's32[1]{0}', space=sflag, size = 0x4, scoped, tag = 'scoped memory for mlp_forward.1']
    #allocation4 [shape = 'u8[32768]{0}', space=vmem, size = 0x8000, scoped, tag = 'input window, operand 3, single buffered']
    #allocation5 [shape = 's32[1]{0}', space=sflag, size = 0x4, scoped, tag = 'scoped memory for mlp_forward.1']
    #allocation6 [shape = 'u8[32768]{0}', space=vmem, size = 0x8000, scoped, tag = 'input window, operand 5, single buffered']
    %12 = vsyncpa [#allocation3], 0
    %13 = vsyncpa [#allocation5], 0
    // Predicated region
    $region2: #{mlp_forward.1} parent=1 // pred_check
      _
    $region3: #{mlp_forward.1} parent=1 // pred_check_branch
      %15 = sbr.rel (0) target = $region5
    $region4: #{mlp_forward.1} parent=1 // pred_region
      _
    $region5: #{mlp_forward.1} parent=1 // pred_fallthru
      _
    // Predicated region
    $region6: #{mlp_forward.1} parent=1 // pred_check
      _
    $region7: #{mlp_forward.1} parent=1 // pred_check_branch
      %17 = sbr.rel (0) target = $region9
    $region8: #{mlp_forward.1} parent=1 // pred_region
      %19 = vsyncadd [#allocation3], 0
      %s20 = sshll.u32 %s1, 4
      %s21 = int_to_ptr.hbm [resolvable:$true] %s20
      %s22 = sshll.u32 [#allocation2], 4
      %s23 = int_to_ptr.vmem [resolvable:$true] %s22
      %28 = dma.hbm_to_vmem [thread:$0]  %s21, 1024, %s23, [#allocation3], 64, 64, 4
    $region9: #{mlp_forward.1} parent=1 // pred_fallthru
      _
    // Predicated region
    $region10: #{mlp_forward.1} parent=1 // pred_check
      _
    $region11: #{mlp_forward.1} parent=1 // pred_check_branch
      %30 = sbr.rel (0) target = $region13
    $region12: #{mlp_forward.1} parent=1 // pred_region
      _
    $region13: #{mlp_forward.1} parent=1 // pred_fallthru
      _
    // Predicated region
    $region14: #{mlp_forward.1} parent=1 // pred_check
      _
    $region15: #{mlp_forward.1} parent=1 // pred_check_branch
      %32 = sbr.rel (0) target = $region17
    $region16: #{mlp_forward.1} parent=1 // pred_region
      %34 = vsyncadd [#allocation5], 0
      %s35 = sshll.u32 %s3, 4
      %s36 = int_to_ptr.hbm [resolvable:$true] %s35
      %s37 = sshll.u32 [#allocation4], 4
      %s38 = int_to_ptr.vmem [resolvable:$true] %s37
      %43 = dma.hbm_to_vmem [thread:$0]  %s36, 1024, %s38, [#allocation5], 64, 64, 4
    $region17: #{mlp_forward.1} parent=1 // pred_fallthru
      _
    // Predicated region
    $region18: #{mlp_forward.1} parent=1 // pred_check
      _
    $region19: #{mlp_forward.1} parent=1 // pred_check_branch
      %45 = sbr.rel (0) target = $region21
    $region20: #{mlp_forward.1} parent=1 // pred_region
      _
    $region21: #{mlp_forward.1} parent=1 // pred_fallthru
      _
    // Predicated region
    $region22: #{mlp_forward.1} parent=1 // pred_check
      _
    $region23: #{mlp_forward.1} parent=1 // pred_check_branch
      %47 = sbr.rel (0) target = $region25
    $region24: #{mlp_forward.1} parent=1 // pred_region
      %49 = vsyncadd [#allocation5], 0
      %s50 = sshll.u32 %s5, 4
      %s51 = int_to_ptr.hbm [resolvable:$true] %s50
      %s52 = sshll.u32 [#allocation6], 4
      %s53 = int_to_ptr.vmem [resolvable:$true] %s52
      %58 = dma.hbm_to_vmem [thread:$0]  %s51, 1024, %s53, [#allocation5], 64, 64, 4
    $region25: #{mlp_forward.1} parent=1 // pred_fallthru
      _
    // Predicated region
    $region26: #{mlp_forward.1} parent=1 // pred_check
      _
    $region27: #{mlp_forward.1} parent=1 // pred_check_branch
      %60 = sbr.rel (0) target = $region29
    $region28: #{mlp_forward.1} parent=1 // pred_region
      _
    $region29: #{mlp_forward.1} parent=1 // pred_fallthru
      _
    // Predicated region
    $region30: #{mlp_forward.1} parent=1 // pred_check
      _
    $region31: #{mlp_forward.1} parent=1 // pred_check_branch
      %62 = sbr.rel (0) target = $region33
    $region32: #{mlp_forward.1} parent=1 // pred_region
      %64 = dma.done [#allocation3], 1024
    $region33: #{mlp_forward.1} parent=1 // pred_fallthru
      _
    // Predicated region
    $region34: #{mlp_forward.1} parent=1 // pred_check
      _
    $region35: #{mlp_forward.1} parent=1 // pred_check_branch
      %66 = sbr.rel (0) target = $region37
    $region36: #{mlp_forward.1} parent=1 // pred_region
      %68 = dma.done [#allocation5], 1024
    $region37: #{mlp_forward.1} parent=1 // pred_fallthru
      _
    // Predicated region
    $region38: #{mlp_forward.1} parent=1 // pred_check
      _
    $region39: #{mlp_forward.1} parent=1 // pred_check_branch
      %70 = sbr.rel (0) target = $region41
    $region40: #{mlp_forward.1} parent=1 // pred_region
      %72 = dma.done [#allocation5], 1024
    $region41: #{mlp_forward.1} parent=1 // pred_fallthru
      _
    %v73 = vld [vmem:[%s0] sm:$0xf]
    %v74 = vld [vmem:[%s0 + $0x4] sm:$0xf]
    %v75 = vld [vmem:[#allocation2] sm:$0xf]
    %v76 = vld [vmem:[#allocation2 + $0x4] sm:$0xf]
    %v77 = vld [vmem:[#allocation2 + $0x8] sm:$0xf]
    %v78 = vld [vmem:[#allocation2 + $0xc] sm:$0xf]
    %v79 = vld [vmem:[#allocation2 + $0x10] sm:$0xf]
    %v80 = vld [vmem:[#allocation2 + $0x14] sm:$0xf]
    %v81 = vld [vmem:[#allocation2 + $0x18] sm:$0xf]
    %v82 = vld [vmem:[#allocation2 + $0x1c] sm:$0xf]
    %v83 = vld [vmem:[#allocation2 + $0x20] sm:$0xf]
    %v84 = vld [vmem:[#allocation2 + $0x24] sm:$0xf]
    %v85 = vld [vmem:[#allocation2 + $0x28] sm:$0xf]
    %v86 = vld [vmem:[#allocation2 + $0x2c] sm:$0xf]
    %v87 = vld [vmem:[#allocation2 + $0x30] sm:$0xf]
    %v88 = vld [vmem:[#allocation2 + $0x34] sm:$0xf]
    %v89 = vld [vmem:[#allocation2 + $0x38] sm:$0xf]
    %v90 = vld [vmem:[#allocation2 + $0x3c] sm:$0xf]
    %v91 = vld [vmem:[%s2] sm:$0x1]
    %v93 = vperm.slane %v91, 0
    %v97 = vunpack.c.l.b16 %v73
    %v98 = vunpack.c.l.b16 %v74
    %v99 = vpack.c.b16 %v98, %v97
    %v117 = vunpack.c.l.b16 %v75
    %v118 = vunpack.c.l.b16 %v76
    %v119 = vunpack.c.l.b16 %v77
    %v120 = vunpack.c.l.b16 %v78
    %v121 = vunpack.c.l.b16 %v79
    %v122 = vunpack.c.l.b16 %v80
    %v123 = vunpack.c.l.b16 %v81
    %v124 = vunpack.c.l.b16 %v82
    %v125 = vunpack.c.l.b16 %v83
    %v126 = vunpack.c.l.b16 %v84
    %v127 = vunpack.c.l.b16 %v85
    %v128 = vunpack.c.l.b16 %v86
    %v129 = vunpack.c.l.b16 %v87
    %v130 = vunpack.c.l.b16 %v88
    %v131 = vunpack.c.l.b16 %v89
    %v132 = vunpack.c.l.b16 %v90
    %v133 = vpack.c.b16 %v118, %v117
    %v134 = vpack.c.b16 %v120, %v119
    %v135 = vpack.c.b16 %v122, %v121
    %v136 = vpack.c.b16 %v124, %v123
    %v137 = vpack.c.b16 %v126, %v125
    %v138 = vpack.c.b16 %v128, %v127
    %v139 = vpack.c.b16 %v130, %v129
    %v140 = vpack.c.b16 %v132, %v131
    %149 = vmatpush.bf16.msra.mxu0 %v140
    %150 = vmatpush.bf16.msra.mxu0 %v139
    %151 = vmatpush.bf16.msra.mxu0 %v138
    %152 = vmatpush.bf16.msra.mxu0 %v137
    %153 = vmatpush.bf16.msra.mxu0 %v136
    %154 = vmatpush.bf16.msra.mxu0 %v135
    %155 = vmatpush.bf16.msra.mxu0 %v134
    %156 = vmatpush.bf16.msra.mxu0 %v133
    %157 = vmatmul.bf16.gmra.mxu0 %v99
    %v158 = vpop.f32.mrf.mxu0
    %v159 = vadd.f32 %v93, %v158
    %v160 = vpop.f32.mrf.mxu0
    %v161 = vadd.f32 %v93, %v160
    %162 = vdwg.mxu0
    %v163 = vmax.f32 %v159, 0.0
    %v164 = vmax.f32 %v161, 0.0
    %v165 = vpack.c.bf16 %v164, %v163
    %v166 = vld [vmem:[#allocation4] sm:$0xf]
    %v167 = vld [vmem:[#allocation4 + $0x4] sm:$0xf]
    %v168 = vld [vmem:[#allocation4 + $0x8] sm:$0xf]
    %v169 = vld [vmem:[#allocation4 + $0xc] sm:$0xf]
    %v170 = vld [vmem:[#allocation4 + $0x10] sm:$0xf]
    %v171 = vld [vmem:[#allocation4 + $0x14] sm:$0xf]
    %v172 = vld [vmem:[#allocation4 + $0x18] sm:$0xf]
    %v173 = vld [vmem:[#allocation4 + $0x1c] sm:$0xf]
    %v174 = vld [vmem:[#allocation4 + $0x20] sm:$0xf]
    %v175 = vld [vmem:[#allocation4 + $0x24] sm:$0xf]
    %v176 = vld [vmem:[#allocation4 + $0x28] sm:$0xf]
    %v177 = vld [vmem:[#allocation4 + $0x2c] sm:$0xf]
    %v178 = vld [vmem:[#allocation4 + $0x30] sm:$0xf]
    %v179 = vld [vmem:[#allocation4 + $0x34] sm:$0xf]
    %v180 = vld [vmem:[#allocation4 + $0x38] sm:$0xf]
    %v181 = vld [vmem:[#allocation4 + $0x3c] sm:$0xf]
    %v182 = vld [vmem:[%s4] sm:$0x1]
    %v184 = vperm.slane %v182, 0
    %v202 = vunpack.c.l.b16 %v166
    %v203 = vunpack.c.l.b16 %v167
    %v204 = vunpack.c.l.b16 %v168
    %v205 = vunpack.c.l.b16 %v169
    %v206 = vunpack.c.l.b16 %v170
    %v207 = vunpack.c.l.b16 %v171
    %v208 = vunpack.c.l.b16 %v172
    %v209 = vunpack.c.l.b16 %v173
    %v210 = vunpack.c.l.b16 %v174
    %v211 = vunpack.c.l.b16 %v175
    %v212 = vunpack.c.l.b16 %v176
    %v213 = vunpack.c.l.b16 %v177
    %v214 = vunpack.c.l.b16 %v178
    %v215 = vunpack.c.l.b16 %v179
    %v216 = vunpack.c.l.b16 %v180
    %v217 = vunpack.c.l.b16 %v181
    %v218 = vpack.c.b16 %v203, %v202
    %v219 = vpack.c.b16 %v205, %v204
    %v220 = vpack.c.b16 %v207, %v206
    %v221 = vpack.c.b16 %v209, %v208
    %v222 = vpack.c.b16 %v211, %v210
    %v223 = vpack.c.b16 %v213, %v212
    %v224 = vpack.c.b16 %v215, %v214
    %v225 = vpack.c.b16 %v217, %v216
    %234 = vmatpush.bf16.msra.mxu0 %v225
    %235 = vmatpush.bf16.msra.mxu0 %v224
    %236 = vmatpush.bf16.msra.mxu0 %v223
    %237 = vmatpush.bf16.msra.mxu0 %v222
    %238 = vmatpush.bf16.msra.mxu0 %v221
    %239 = vmatpush.bf16.msra.mxu0 %v220
    %240 = vmatpush.bf16.msra.mxu0 %v219
    %241 = vmatpush.bf16.msra.mxu0 %v218
    %242 = vmatmul.bf16.gmra.mxu0 %v165
    %v243 = vpop.f32.mrf.mxu0
    %v244 = vadd.f32 %v184, %v243
    %v245 = vpop.f32.mrf.mxu0
    %v246 = vadd.f32 %v184, %v245
    %247 = vdwg.mxu0
    %v248 = vmax.f32 %v244, 0.0
    %v249 = vmax.f32 %v246, 0.0
    %v250 = vpack.c.bf16 %v249, %v248
    %v251 = vld [vmem:[#allocation6] sm:$0xf]
    %v252 = vld [vmem:[#allocation6 + $0x4] sm:$0xf]
    %v253 = vld [vmem:[#allocation6 + $0x8] sm:$0xf]
    %v254 = vld [vmem:[#allocation6 + $0xc] sm:$0xf]
    %v255 = vld [vmem:[#allocation6 + $0x10] sm:$0xf]
    %v256 = vld [vmem:[#allocation6 + $0x14] sm:$0xf]
    %v257 = vld [vmem:[#allocation6 + $0x18] sm:$0xf]
    %v258 = vld [vmem:[#allocation6 + $0x1c] sm:$0xf]
    %v259 = vld [vmem:[#allocation6 + $0x20] sm:$0xf]
    %v260 = vld [vmem:[#allocation6 + $0x24] sm:$0xf]
    %v261 = vld [vmem:[#allocation6 + $0x28] sm:$0xf]
    %v262 = vld [vmem:[#allocation6 + $0x2c] sm:$0xf]
    %v263 = vld [vmem:[#allocation6 + $0x30] sm:$0xf]
    %v264 = vld [vmem:[#allocation6 + $0x34] sm:$0xf]
    %v265 = vld [vmem:[#allocation6 + $0x38] sm:$0xf]
    %v266 = vld [vmem:[#allocation6 + $0x3c] sm:$0xf]
    %v267 = vld [vmem:[%s6] sm:$0x1]
    %v269 = vperm.slane %v267, 0
    %v287 = vunpack.c.l.b16 %v251
    %v288 = vunpack.c.l.b16 %v252
    %v289 = vunpack.c.l.b16 %v253
    %v290 = vunpack.c.l.b16 %v254
    %v291 = vunpack.c.l.b16 %v255
    %v292 = vunpack.c.l.b16 %v256
    %v293 = vunpack.c.l.b16 %v257
    %v294 = vunpack.c.l.b16 %v258
    %v295 = vunpack.c.l.b16 %v259
    %v296 = vunpack.c.l.b16 %v260
    %v297 = vunpack.c.l.b16 %v261
    %v298 = vunpack.c.l.b16 %v262
    %v299 = vunpack.c.l.b16 %v263
    %v300 = vunpack.c.l.b16 %v264
    %v301 = vunpack.c.l.b16 %v265
    %v302 = vunpack.c.l.b16 %v266
    %v303 = vpack.c.b16 %v288, %v287
    %v304 = vpack.c.b16 %v290, %v289
    %v305 = vpack.c.b16 %v292, %v291
    %v306 = vpack.c.b16 %v294, %v293
    %v307 = vpack.c.b16 %v296, %v295
    %v308 = vpack.c.b16 %v298, %v297
    %v309 = vpack.c.b16 %v300, %v299
    %v310 = vpack.c.b16 %v302, %v301
    %319 = vmatpush.bf16.msra.mxu0 %v310
    %320 = vmatpush.bf16.msra.mxu0 %v309
    %321 = vmatpush.bf16.msra.mxu0 %v308
    %322 = vmatpush.bf16.msra.mxu0 %v307
    %323 = vmatpush.bf16.msra.mxu0 %v306
    %324 = vmatpush.bf16.msra.mxu0 %v305
    %325 = vmatpush.bf16.msra.mxu0 %v304
    %326 = vmatpush.bf16.msra.mxu0 %v303
    %327 = vmatmul.bf16.gmra.mxu0 %v250
    %v328 = vpop.f32.mrf.mxu0
    %v329 = vadd.f32 %v269, %v328
    %v330 = vpop.f32.mrf.mxu0
    %v331 = vadd.f32 %v269, %v330
    %332 = vdwg.mxu0
    %333 = vst [vmem:[%s7] sm:$0xff] %v329
    %334 = vst [vmem:[%s7 + $0x8] sm:$0xff] %v331
    // Predicated region
    $region42: #{mlp_forward.1} parent=1 // pred_check
      _
    $region43: #{mlp_forward.1} parent=1 // pred_check_branch
      %336 = sbr.rel (0) target = $region45
    $region44: #{mlp_forward.1} parent=1 // pred_region
      _
    $region45: #{mlp_forward.1} parent=1 // pred_fallthru
      _
    // Predicated region
    $region46: #{mlp_forward.1} parent=1 // pred_check
      _
    $region47: #{mlp_forward.1} parent=1 // pred_check_branch
      %338 = sbr.rel (0) target = $region49
    $region48: #{mlp_forward.1} parent=1 // pred_region
      _
    $region49: #{mlp_forward.1} parent=1 // pred_fallthru
      _
    %339 = vsyncpa [#allocation3], 1
    %340 = vsyncpa [#allocation5], 1

</llo_original>
